<compile_context>
chip_gen: v7x
topology: tpu7x:2x2x1
jax: 0.10.0
libtpu: 0.0.40
codegen_flags: <defaults>
</compile_context>

<pallas_src>
import jax
import jax.numpy as jnp
from jax.experimental import pallas as pl
from jax.experimental.pallas import tpu as pltpu


# ----------------------------------------------------------------------------
# Kernel
# ----------------------------------------------------------------------------
def gated_fusion_kernel(x_ref, y_ref, w_ref, v_ref, out_ref):
    """One (C, TN) pixel tile for both branches.

    x_ref, y_ref : (C, TN)        activations, channels on sublanes
    w_ref        : (4, 2H, 2H)    packed block-diagonal weights (H = 3C)
                    [0][:, :2C]  = diag(W1a, W1b)     (2H, 2C)
                    [1]          = diag(W2a, W2b)     (2H, 2H)
                    [2]          = diag(W3a, W3b)     (2H, 2H)
                    [3][:2C, :]  = diag(W4a, W4b)     (2C, 2H)
    v_ref        : (2H, 8)        packed column vectors
                    col 0,1,2 = b1,b2,b3 (2H)   col 3 = b4 (2C)
                    col 4 = bn_scale (2C)        col 5 = bn_shift (2C)
    out_ref      : (C, TN)
    """
    cdim = x_ref.shape[0]
    c2 = 2 * cdim

    x = x_ref[...].astype(jnp.float32)
    y = y_ref[...].astype(jnp.float32)

    # Static Ref-level slices: only the live sub-blocks of the packed slabs
    # are ever loaded (zero padding of the slab is never touched).
    b1 = v_ref[:, 0:1]
    b2 = v_ref[:, 1:2]
    b3 = v_ref[:, 2:3]
    b4 = v_ref[:c2, 3:4]
    bn_scale = v_ref[:c2, 4:5]
    bn_shift = v_ref[:c2, 5:6]

    # Layer 1 (both branches fused; block-diagonal split as two K=C dots to
    # avoid an in-kernel sublane concat of x and y -- mathematically identical).
    h = (jnp.dot(w_ref[0, :, :cdim], x, preferred_element_type=jnp.float32)
         + jnp.dot(w_ref[0, :, cdim:c2], y, preferred_element_type=jnp.float32)
         + b1)
    h = jnp.maximum(h, 0.0)                                              # relu1
    # Layers 2, 3 (single block-diagonal dot each).
    h = jnp.maximum(
        jnp.dot(w_ref[1], h, preferred_element_type=jnp.float32) + b2, 0.0)  # relu2
    h = jnp.maximum(
        jnp.dot(w_ref[2], h, preferred_element_type=jnp.float32) + b3, 0.0)  # relu3
    # Layer 4 -> (2C, TN)
    h = jnp.dot(w_ref[3, :c2, :], h, preferred_element_type=jnp.float32) + b4
    h = jnp.maximum(h, 0.0)                                              # relu4
    h = jnp.maximum(h * bn_scale + bn_shift, 0.0)                        # BN(eval)+act

    z1 = h[:cdim, :]
    z2 = h[cdim:c2, :]
    z = jax.nn.sigmoid(z1 + z2)
    out_ref[...] = (z1 * z + z2 * (1.0 - z)).astype(out_ref.dtype)


# ----------------------------------------------------------------------------
# Wrapper
# ----------------------------------------------------------------------------
def _pick_lane_tile(hw, requested):
    """Largest multiple of 128 that divides hw and is <= requested, else hw."""
    if hw % 128 != 0:
        return hw                      # full row; legal (equals array dim)
    t = max(128, (min(requested, hw) // 128) * 128)
    while hw % t != 0:
        t -= 128
    return t


def gated_fusion(x_nchw, y_nchw, w_all, v_all, *, tn=2048):
    """x_nchw, y_nchw: (N, C, H, W) float32. Returns (N, C, H, W)."""
    N, C, H, W = x_nchw.shape
    HW = H * W
    h2 = w_all.shape[1]                # 2 * hidden = 6 * C
    c2 = 2 * C

    tn_eff = _pick_lane_tile(HW, tn)
    # Keep at least 2 grid steps so both v7x TensorCores get work.
    if N * (HW // tn_eff) < 2 and tn_eff % 2 == 0 and (tn_eff // 2) % 128 == 0:
        tn_eff //= 2
    grid = (N, HW // tn_eff)

    # Pure reshapes of the NCHW layout -- no transposes.
    x3 = x_nchw.reshape(N, C, HW)
    y3 = y_nchw.reshape(N, C, HW)

    io_spec = pl.BlockSpec((None, C, tn_eff), lambda b, t: (b, 0, t))
    w_spec = pl.BlockSpec(w_all.shape, lambda b, t: (0, 0, 0))   # VMEM-resident
    v_spec = pl.BlockSpec(v_all.shape, lambda b, t: (0, 0))      # VMEM-resident

    # Advisory cost so XLA schedules neighbouring ops sensibly.
    flops = 2 * N * HW * (h2 * c2 + 2 * h2 * h2 + c2 * h2)
    cost = pl.CostEstimate(
        flops=flops,
        transcendentals=N * HW * C,                       # sigmoid
        bytes_accessed=(2 + 1) * N * C * HW * 4 + w_all.size * 4 + v_all.size * 4,
    )

    out3 = pl.pallas_call(
        gated_fusion_kernel,
        out_shape=jax.ShapeDtypeStruct((N, C, HW), x_nchw.dtype),
        grid_spec=pltpu.PrefetchScalarGridSpec(
            num_scalar_prefetch=0,
            grid=grid,
            in_specs=[io_spec, io_spec, w_spec, v_spec],
            out_specs=pl.BlockSpec((None, C, tn_eff), lambda b, t: (b, 0, t)),
        ),
        compiler_params=pltpu.CompilerParams(
            dimension_semantics=("parallel", "parallel")),
        cost_estimate=cost,
    )(x3, y3, w_all, v_all)

    return out3.reshape(N, C, H, W)


# ----------------------------------------------------------------------------
# Parameters (synthetic, PyTorch conventions) and packing
# ----------------------------------------------------------------------------
def make_fc_params(key, dims):
    """One FC block. Linear weights are PyTorch-style (out, in); BN is
    eval-mode running stats folded into per-channel scale/shift."""
    hidden = dims * 3
    ks = jax.random.split(key, 12)
    w1 = jax.random.normal(ks[0], (hidden, dims), jnp.float32) * 0.2
    b1 = jax.random.normal(ks[1], (hidden,), jnp.float32) * 0.1
    w2 = jax.random.normal(ks[2], (hidden, hidden), jnp.float32) * 0.2
    b2 = jax.random.normal(ks[3], (hidden,), jnp.float32) * 0.1
    w3 = jax.random.normal(ks[4], (hidden, hidden), jnp.float32) * 0.2
    b3 = jax.random.normal(ks[5], (hidden,), jnp.float32) * 0.1
    w4 = jax.random.normal(ks[6], (dims, hidden), jnp.float32) * 0.2
    b4 = jax.random.normal(ks[7], (dims,), jnp.float32) * 0.1
    eps = 1e-5
    gamma = 1.0 + 0.1 * jax.random.normal(ks[8], (dims,), jnp.float32)
    beta = 0.1 * jax.random.normal(ks[9], (dims,), jnp.float32)
    running_mean = 0.1 * jax.random.normal(ks[10], (dims,), jnp.float32)
    running_var = jax.random.uniform(ks[11], (dims,), jnp.float32, 0.5, 1.5)
    inv = gamma / jnp.sqrt(running_var + eps)
    bn_scale = inv
    bn_shift = beta - running_mean * inv
    return (w1, b1, w2, b2, w3, b3, w4, b4, bn_scale, bn_shift)


def pack_params(p1, p2, dims):
    """Pack both branches into one weight slab and one vector slab."""
    hidden = dims * 3
    h2 = 2 * hidden
    c2 = 2 * dims
    (w1a, b1a, w2a, b2a, w3a, b3a, w4a, b4a, bnsa, bnba) = p1
    (w1b, b1b, w2b, b2b, w3b, b3b, w4b, b4b, bnsb, bnbb) = p2

    def blockdiag(a, b):
        ra, ca = a.shape
        rb, cb = b.shape
        m = jnp.zeros((ra + rb, ca + cb), jnp.float32)
        m = m.at[:ra, :ca].set(a)
        m = m.at[ra:, ca:].set(b)
        return m

    w_all = jnp.zeros((4, h2, h2), jnp.float32)
    w_all = w_all.at[0, :, :c2].set(blockdiag(w1a, w1b))   # (2H, 2C)
    w_all = w_all.at[1].set(blockdiag(w2a, w2b))           # (2H, 2H)
    w_all = w_all.at[2].set(blockdiag(w3a, w3b))           # (2H, 2H)
    w_all = w_all.at[3, :c2, :].set(blockdiag(w4a, w4b))   # (2C, 2H)

    v_all = jnp.zeros((h2, 8), jnp.float32)
    v_all = v_all.at[:, 0].set(jnp.concatenate([b1a, b1b]))
    v_all = v_all.at[:, 1].set(jnp.concatenate([b2a, b2b]))
    v_all = v_all.at[:, 2].set(jnp.concatenate([b3a, b3b]))
    v_all = v_all.at[:c2, 3].set(jnp.concatenate([b4a, b4b]))
    v_all = v_all.at[:c2, 4].set(jnp.concatenate([bnsa, bnsb]))
    v_all = v_all.at[:c2, 5].set(jnp.concatenate([bnba, bnbb]))
    return w_all, v_all


# ----------------------------------------------------------------------------
# Pure-JAX reference (matches the PyTorch forward, eval BN)
# ----------------------------------------------------------------------------
def reference_gated_fusion(x_nchw, y_nchw, p1, p2):
    def fc(inp, p):
        w1, b1, w2, b2, w3, b3, w4, b4, bns, bnb = p
        h = jnp.transpose(inp, (0, 2, 3, 1))            # NCHW -> NHWC
        h = jax.nn.relu(h @ w1.T + b1)
        h = jax.nn.relu(h @ w2.T + b2)
        h = jax.nn.relu(h @ w3.T + b3)
        h = h @ w4.T + b4
        h = jnp.transpose(h, (0, 3, 1, 2))              # NHWC -> NCHW
        h = jax.nn.relu(h)
        h = h * bns[None, :, None, None] + bnb[None, :, None, None]
        h = jax.nn.relu(h)
        return h

    z1 = fc(x_nchw, p1)
    z2 = fc(y_nchw, p2)
    z = jax.nn.sigmoid(z1 + z2)
    return z1 * z + z2 * (1.0 - z)


if __name__ == "__main__":
    dims = 4
    N, H, W = 2, 16, 16

    key = jax.random.PRNGKey(0)
    kx, ky, k1, k2 = jax.random.split(key, 4)
    x = jax.random.normal(kx, (N, dims, H, W), jnp.float32)
    y = jax.random.normal(ky, (N, dims, H, W), jnp.float32)

    p1 = make_fc_params(k1, dims)
    p2 = make_fc_params(k2, dims)
    w_all, v_all = pack_params(p1, p2, dims)

    out = gated_fusion(x, y, w_all, v_all, tn=2048)
    out = jax.block_until_ready(out)

    ref = reference_gated_fusion(x, y, p1, p2)
    assert out.shape == (N, dims, H, W)
    assert jnp.allclose(out, ref, atol=1e-4, rtol=1e-4), "mismatch vs reference"

    print("KERNEL_OK")
</pallas_src>

<mosaic_0001>
module attributes {stable_mosaic.version = 11 : i64} {
  func.func @gated_fusion_kernel(%arg0: i32, %arg1: i32, %arg2: memref<1x4x256xf32, #tpu.memory_space<vmem>>, %arg3: memref<1x4x256xf32, #tpu.memory_space<vmem>>, %arg4: memref<4x24x24xf32, #tpu.memory_space<vmem>>, %arg5: memref<24x8xf32, #tpu.memory_space<vmem>>, %arg6: memref<1x4x256xf32, #tpu.memory_space<vmem>>) attributes {dimension_semantics = [#tpu.dimension_semantics<parallel>, #tpu.dimension_semantics<parallel>], iteration_bounds = array<i64: 2, 1>, scalar_prefetch = 0 : i64, scratch_operands = 0 : i64, tpu.core_type = #tpu.core_type<tc>, window_params = [{transform_indices = @transform_0, window_bounds = array<i64: 1, 4, 256>}, {transform_indices = @transform_1, window_bounds = array<i64: 1, 4, 256>}, {pipeline_mode = #tpu.pipeline_mode<synchronous>, transform_indices = @transform_2, window_bounds = array<i64: 4, 24, 24>}, {pipeline_mode = #tpu.pipeline_mode<synchronous>, transform_indices = @transform_3, window_bounds = array<i64: 24, 8>}, {transform_indices = @transform_4, window_bounds = array<i64: 1, 4, 256>}]} {
    %c0 = arith.constant 0 : index
    %c0_0 = arith.constant 0 : index
    %c0_1 = arith.constant 0 : index
    %0 = vector.load %arg2[%c0, %c0_0, %c0_1] : memref<1x4x256xf32, #tpu.memory_space<vmem>>, vector<1x4x256xf32>
    %1 = vector.shape_cast %0 : vector<1x4x256xf32> to vector<4x256xf32>
    %c0_2 = arith.constant 0 : index
    %c0_3 = arith.constant 0 : index
    %c0_4 = arith.constant 0 : index
    %2 = vector.load %arg3[%c0_2, %c0_3, %c0_4] : memref<1x4x256xf32, #tpu.memory_space<vmem>>, vector<1x4x256xf32>
    %3 = vector.shape_cast %2 : vector<1x4x256xf32> to vector<4x256xf32>
    %c0_5 = arith.constant 0 : index
    %c0_6 = arith.constant 0 : index
    %4 = vector.load %arg5[%c0_5, %c0_6] : memref<24x8xf32, #tpu.memory_space<vmem>>, vector<24x1xf32>
    %c0_7 = arith.constant 0 : index
    %c1 = arith.constant 1 : index
    %5 = vector.load %arg5[%c0_7, %c1] : memref<24x8xf32, #tpu.memory_space<vmem>>, vector<24x1xf32>
    %c0_8 = arith.constant 0 : index
    %c2 = arith.constant 2 : index
    %6 = vector.load %arg5[%c0_8, %c2] : memref<24x8xf32, #tpu.memory_space<vmem>>, vector<24x1xf32>
    %c0_9 = arith.constant 0 : index
    %c3 = arith.constant 3 : index
    %7 = vector.load %arg5[%c0_9, %c3] : memref<24x8xf32, #tpu.memory_space<vmem>>, vector<8x1xf32>
    %c0_10 = arith.constant 0 : index
    %c4 = arith.constant 4 : index
    %8 = vector.load %arg5[%c0_10, %c4] : memref<24x8xf32, #tpu.memory_space<vmem>>, vector<8x1xf32>
    %c0_11 = arith.constant 0 : index
    %c5 = arith.constant 5 : index
    %9 = vector.load %arg5[%c0_11, %c5] : memref<24x8xf32, #tpu.memory_space<vmem>>, vector<8x1xf32>
    %c0_12 = arith.constant 0 : index
    %c0_13 = arith.constant 0 : index
    %c0_14 = arith.constant 0 : index
    %10 = vector.load %arg4[%c0_12, %c0_13, %c0_14] : memref<4x24x24xf32, #tpu.memory_space<vmem>>, vector<1x24x4xf32>
    %11 = vector.shape_cast %10 : vector<1x24x4xf32> to vector<24x4xf32>
    %cst = arith.constant dense<0.000000e+00> : vector<24x256xf32>
    %12 = tpu.matmul %11, %1, %cst {dimension_numbers = #tpu.dot_dimension_numbers<[1], [0], [0], [1], [0, 0, 1, 1], [], []>} : vector<24x4xf32>, vector<4x256xf32>, vector<24x256xf32> -> vector<24x256xf32>
    %c0_15 = arith.constant 0 : index
    %c0_16 = arith.constant 0 : index
    %c4_17 = arith.constant 4 : index
    %13 = vector.load %arg4[%c0_15, %c0_16, %c4_17] : memref<4x24x24xf32, #tpu.memory_space<vmem>>, vector<1x24x4xf32>
    %14 = vector.shape_cast %13 : vector<1x24x4xf32> to vector<24x4xf32>
    %cst_18 = arith.constant dense<0.000000e+00> : vector<24x256xf32>
    %15 = tpu.matmul %14, %3, %cst_18 {dimension_numbers = #tpu.dot_dimension_numbers<[1], [0], [0], [1], [0, 0, 1, 1], [], []>} : vector<24x4xf32>, vector<4x256xf32>, vector<24x256xf32> -> vector<24x256xf32>
    %16 = arith.addf %12, %15 : vector<24x256xf32>
    %17 = vector.broadcast %4 : vector<24x1xf32> to vector<24x256xf32>
    %18 = arith.addf %16, %17 : vector<24x256xf32>
    %cst_19 = arith.constant 0.000000e+00 : f32
    %19 = vector.broadcast %cst_19 : f32 to vector<24x256xf32>
    %20 = arith.maximumf %18, %19 : vector<24x256xf32>
    %c1_20 = arith.constant 1 : index
    %c0_21 = arith.constant 0 : index
    %c0_22 = arith.constant 0 : index
    %21 = vector.load %arg4[%c1_20, %c0_21, %c0_22] : memref<4x24x24xf32, #tpu.memory_space<vmem>>, vector<1x24x24xf32>
    %22 = vector.shape_cast %21 : vector<1x24x24xf32> to vector<24x24xf32>
    %cst_23 = arith.constant dense<0.000000e+00> : vector<24x256xf32>
    %23 = tpu.matmul %22, %20, %cst_23 {dimension_numbers = #tpu.dot_dimension_numbers<[1], [0], [0], [1], [0, 0, 1, 1], [], []>} : vector<24x24xf32>, vector<24x256xf32>, vector<24x256xf32> -> vector<24x256xf32>
    %24 = vector.broadcast %5 : vector<24x1xf32> to vector<24x256xf32>
    %25 = arith.addf %23, %24 : vector<24x256xf32>
    %cst_24 = arith.constant 0.000000e+00 : f32
    %26 = vector.broadcast %cst_24 : f32 to vector<24x256xf32>
    %27 = arith.maximumf %25, %26 : vector<24x256xf32>
    %c2_25 = arith.constant 2 : index
    %c0_26 = arith.constant 0 : index
    %c0_27 = arith.constant 0 : index
    %28 = vector.load %arg4[%c2_25, %c0_26, %c0_27] : memref<4x24x24xf32, #tpu.memory_space<vmem>>, vector<1x24x24xf32>
    %29 = vector.shape_cast %28 : vector<1x24x24xf32> to vector<24x24xf32>
    %cst_28 = arith.constant dense<0.000000e+00> : vector<24x256xf32>
    %30 = tpu.matmul %29, %27, %cst_28 {dimension_numbers = #tpu.dot_dimension_numbers<[1], [0], [0], [1], [0, 0, 1, 1], [], []>} : vector<24x24xf32>, vector<24x256xf32>, vector<24x256xf32> -> vector<24x256xf32>
    %31 = vector.broadcast %6 : vector<24x1xf32> to vector<24x256xf32>
    %32 = arith.addf %30, %31 : vector<24x256xf32>
    %cst_29 = arith.constant 0.000000e+00 : f32
    %33 = vector.broadcast %cst_29 : f32 to vector<24x256xf32>
    %34 = arith.maximumf %32, %33 : vector<24x256xf32>
    %c3_30 = arith.constant 3 : index
    %c0_31 = arith.constant 0 : index
    %c0_32 = arith.constant 0 : index
    %35 = vector.load %arg4[%c3_30, %c0_31, %c0_32] : memref<4x24x24xf32, #tpu.memory_space<vmem>>, vector<1x8x24xf32>
    %36 = vector.shape_cast %35 : vector<1x8x24xf32> to vector<8x24xf32>
    %cst_33 = arith.constant dense<0.000000e+00> : vector<8x256xf32>
    %37 = tpu.matmul %36, %34, %cst_33 {dimension_numbers = #tpu.dot_dimension_numbers<[1], [0], [0], [1], [0, 0, 1, 1], [], []>} : vector<8x24xf32>, vector<24x256xf32>, vector<8x256xf32> -> vector<8x256xf32>
    %38 = vector.broadcast %7 : vector<8x1xf32> to vector<8x256xf32>
    %39 = arith.addf %37, %38 : vector<8x256xf32>
    %cst_34 = arith.constant 0.000000e+00 : f32
    %40 = vector.broadcast %cst_34 : f32 to vector<8x256xf32>
    %41 = arith.maximumf %39, %40 : vector<8x256xf32>
    %42 = vector.broadcast %8 : vector<8x1xf32> to vector<8x256xf32>
    %43 = arith.mulf %41, %42 : vector<8x256xf32>
    %44 = vector.broadcast %9 : vector<8x1xf32> to vector<8x256xf32>
    %45 = arith.addf %43, %44 : vector<8x256xf32>
    %cst_35 = arith.constant 0.000000e+00 : f32
    %46 = vector.broadcast %cst_35 : f32 to vector<8x256xf32>
    %47 = arith.maximumf %45, %46 : vector<8x256xf32>
    %48 = vector.extract_strided_slice %47 {offsets = [0, 0], sizes = [4, 256], strides = [1, 1]} : vector<8x256xf32> to vector<4x256xf32>
    %49 = vector.extract_strided_slice %47 {offsets = [4, 0], sizes = [4, 256], strides = [1, 1]} : vector<8x256xf32> to vector<4x256xf32>
    %50 = arith.addf %48, %49 : vector<4x256xf32>
    %51 = arith.negf %50 : vector<4x256xf32>
    %52 = math.exp %51 : vector<4x256xf32>
    %cst_36 = arith.constant 1.000000e+00 : f32
    %53 = vector.broadcast %cst_36 : f32 to vector<4x256xf32>
    %54 = arith.addf %53, %52 : vector<4x256xf32>
    %55 = arith.divf %53, %54 : vector<4x256xf32>
    %56 = arith.mulf %48, %55 : vector<4x256xf32>
    %cst_37 = arith.constant 1.000000e+00 : f32
    %57 = vector.broadcast %cst_37 : f32 to vector<4x256xf32>
    %58 = arith.subf %57, %55 : vector<4x256xf32>
    %59 = arith.mulf %49, %58 : vector<4x256xf32>
    %60 = arith.addf %56, %59 : vector<4x256xf32>
    %c0_38 = arith.constant 0 : index
    %c0_39 = arith.constant 0 : index
    %c0_40 = arith.constant 0 : index
    %61 = vector.load %arg6[%c0_38, %c0_39, %c0_40] : memref<1x4x256xf32, #tpu.memory_space<vmem>>, vector<1x4x256xf32>
    %62 = vector.shape_cast %61 : vector<1x4x256xf32> to vector<4x256xf32>
    %63 = vector.shape_cast %60 : vector<4x256xf32> to vector<1x4x256xf32>
    tpu.vector_store %arg6[%c0_38, %c0_39, %c0_40], %63 {strides = array<i32>} : memref<1x4x256xf32, #tpu.memory_space<vmem>>, vector<1x4x256xf32>,
    return
  }
  func.func @transform_0(%arg0: i32, %arg1: i32) -> (i32, i32, i32) {
    %c0_i32 = arith.constant 0 : i32
    %c0_i32_0 = arith.constant 0 : i32
    return %arg0, %c0_i32, %arg1 : i32, i32, i32
  }
  func.func @transform_1(%arg0: i32, %arg1: i32) -> (i32, i32, i32) {
    %c0_i32 = arith.constant 0 : i32
    %c0_i32_0 = arith.constant 0 : i32
    return %arg0, %c0_i32, %arg1 : i32, i32, i32
  }
  func.func @transform_2(%arg0: i32, %arg1: i32) -> (i32, i32, i32) {
    %c0_i32 = arith.constant 0 : i32
    %c0_i32_0 = arith.constant 0 : i32
    %c0_i32_1 = arith.constant 0 : i32
    %c0_i32_2 = arith.constant 0 : i32
    return %c0_i32, %c0_i32_0, %c0_i32_1 : i32, i32, i32
  }
  func.func @transform_3(%arg0: i32, %arg1: i32) -> (i32, i32) {
    %c0_i32 = arith.constant 0 : i32
    %c0_i32_0 = arith.constant 0 : i32
    %c0_i32_1 = arith.constant 0 : i32
    return %c0_i32, %c0_i32_0 : i32, i32
  }
  func.func @transform_4(%arg0: i32, %arg1: i32) -> (i32, i32, i32) {
    %c0_i32 = arith.constant 0 : i32
    %c0_i32_0 = arith.constant 0 : i32
    return %arg0, %c0_i32, %arg1 : i32, i32, i32
  }
}

</mosaic_0001>

<llo_original>
// kernel: tpu_custom_call.1
$region0: #{tpu_custom_call.1}
  #allocation0 [shape = 'u32[]', space=smem, size = 0x4, offset = 0x4, fixed_abs, tag = 'smem constant byte address 0x4 - core index']
  #allocation1 [shape = 'u32[144,128]{1,0:T(1,128)}', space=vmem, size = 0x12000, scoped, tag = 'internal scratch']
  %s0 = inlined_call_operand.vmem [shape: f32[2,4,256], index: 0, kind: input, shape index: {}]
  %s1 = inlined_call_operand.vmem [shape: f32[2,4,256], index: 1, kind: input, shape index: {}]
  %s2 = inlined_call_operand.hbm [shape: f32[4,24,24], index: 2, kind: input, shape index: {}]
  %s3 = inlined_call_operand.vmem [shape: f32[24,8], index: 3, kind: input, shape index: {}]
  %s4 = inlined_call_operand.hbm [shape: f32[2,4,256], index: 4, kind: output, shape index: {}]
  %s5 = sld [smem:[#allocation0]]
  $region53: #{tpu_custom_call.1} parent=0
    _
  %s7 = ssub.s32 1, %s5
  %s8 = scalar_select 0, %s7, %s5
  $region1: #{tpu_custom_call.1} parent=0
    #allocation2 [shape = 'u8[49152]{0}', space=vmem, size = 0xc000, scoped, tag = 'input window, operand 2, single buffered']
    #allocation3 [shape = 's32[2]{0}', space=sflag, size = 0x8, scoped, tag = 'scoped memory for tpu_custom_call.1']
    #allocation4 [shape = 's32[2]{0}', space=sflag, size = 0x8, scoped, tag = 'scoped memory for tpu_custom_call.1']
    #allocation5 [shape = 'u8[8192]{0}', space=vmem, size = 0x2000, scoped, tag = 'output window, operand 0']
    %9 = vsyncpa [#allocation3], 0
    %10 = vsyncpa [#allocation4], 0
    %s11 = scalar_lea.sflag [#allocation4], 1
    %12 = vsyncpa %s11, 0
    loop: start=0, step=1, limit=4
    $region2: #{tpu_custom_call.1} parent=1 // loop_pre_header
      _
    $region3: #{tpu_custom_call.1} parent=1 // loop_header
      %s14 = sphi 0, %s18
      %p15 = scmp.ge.s32.totalorder %s14, 4
      %s21 = sphi 0, %s33
      %s22 = sphi 0, %s29
      %s23 = sphi 0, %s21
      %s24 = sphi 0, %s22
      %s25 = sphi 0, %s23
      %s26 = sphi 0, %s24
      %s38 = sphi 0, %s40
      %s41 = sphi 0, %s38
      %s42 = sphi 0, %s41
      %s58 = sphi 0, %s42
      %s66 = sphi 0, %s68
      %s69 = sphi 0, %s66
      %s70 = sphi 0, %s69
      %s86 = sphi 0, %s70
      %s90 = sphi 0, %s90
      %s92 = sphi 0, %s90
      %s93 = sphi 0, %s92
      %s107 = sphi 0, %s93
      %s111 = sphi 0, %s111
      %s113 = sphi 0, %s111
      %s114 = sphi 0, %s113
      %s128 = sphi 0, %s114
      %s136 = sphi 0, %s138
      %s139 = sphi 0, %s136
      %s140 = sphi 0, %s139
      %s156 = sphi 0, %s140
    $region4: #{tpu_custom_call.1} parent=1 // loop_header_branch
      %17 = sbr.rel (%p15) target = $region8
    $region5: #{tpu_custom_call.1} parent=1 // loop_body
      %s19 = ssub.s32 %s14, 1
      %s20 = ssub.s32 %s14, 2
      %s27 = sadd.s32 1, %s22
      %p28 = scmp.ge.s32.totalorder %s27, 1
      %s29 = scalar_select %p28, 0, %s27
      %s30 = sadd.s32 1, %s21
      %s31 = scalar_select %p28, %s30, %s21
      %p32 = scmp.ge.s32.totalorder %s31, 2
      %s33 = scalar_select %p32, 0, %s31
      %s34 = ssub.s32 %s21, %s33
      %s35 = ssub.s32 %s22, %s29
      %s36 = sor.u32 %s34, %s35
      %p37 = scmp.eq.s32.totalorder %s36, 0
      %s39 = sadd.s32 %s38, 1
      %s40 = scalar_select %p37, %s38, %s39
      %p43 = pneg %p37
      %p44 = scmp.eq.s32.totalorder %s14, 1
      %p45 = por %p43, %p44
      %p46 = scmp.ne.s32.totalorder %s38, %s41
      %p47 = scmp.eq.s32.totalorder %s14, 0
      %p48 = por %p46, %p47
      %p49 = scmp.ne.s32.totalorder %s38, %s41
      %p50 = scmp.eq.s32.totalorder %s19, 1
      %p51 = por %p49, %p50
      %p52 = scmp.ne.s32.totalorder %s41, %s42
      %p53 = scmp.eq.s32.totalorder %s19, 0
      %p54 = por %p52, %p53
      %p55 = scmp.ne.s32.totalorder %s41, %s42
      %p56 = scmp.eq.s32.totalorder %s20, 1
      %p57 = por %p55, %p56
      %p59 = scmp.ne.s32.totalorder %s42, %s58
      %p60 = scmp.eq.s32.totalorder %s20, 0
      %p61 = por %p59, %p60
      %s62 = ssub.s32 %s21, %s33
      %s63 = ssub.s32 %s22, %s29
      %s64 = sor.u32 %s62, %s63
      %p65 = scmp.eq.s32.totalorder %s64, 0
      %s67 = sadd.s32 %s66, 1
      %s68 = scalar_select %p65, %s66, %s67
      %p71 = pneg %p65
      %p72 = scmp.eq.s32.totalorder %s14, 1
      %p73 = por %p71, %p72
      %p74 = scmp.ne.s32.totalorder %s66, %s69
      %p75 = scmp.eq.s32.totalorder %s14, 0
      %p76 = por %p74, %p75
      %p77 = scmp.ne.s32.totalorder %s66, %s69
      %p78 = scmp.eq.s32.totalorder %s19, 1
      %p79 = por %p77, %p78
      %p80 = scmp.ne.s32.totalorder %s69, %s70
      %p81 = scmp.eq.s32.totalorder %s19, 0
      %p82 = por %p80, %p81
      %p83 = scmp.ne.s32.totalorder %s69, %s70
      %p84 = scmp.eq.s32.totalorder %s20, 1
      %p85 = por %p83, %p84
      %p87 = scmp.ne.s32.totalorder %s70, %s86
      %p88 = scmp.eq.s32.totalorder %s20, 0
      %p89 = por %p87, %p88
      %s91 = sadd.s32 %s90, 1
      %p94 = scmp.eq.s32.totalorder %s14, 1
      %p95 = scmp.ne.s32.totalorder %s90, %s92
      %p96 = scmp.eq.s32.totalorder %s14, 0
      %p97 = por %p95, %p96
      %p98 = scmp.ne.s32.totalorder %s90, %s92
      %p99 = scmp.eq.s32.totalorder %s19, 1
      %p100 = por %p98, %p99
      %p101 = scmp.ne.s32.totalorder %s92, %s93
      %p102 = scmp.eq.s32.totalorder %s19, 0
      %p103 = por %p101, %p102
      %p104 = scmp.ne.s32.totalorder %s92, %s93
      %p105 = scmp.eq.s32.totalorder %s20, 1
      %p106 = por %p104, %p105
      %p108 = scmp.ne.s32.totalorder %s93, %s107
      %p109 = scmp.eq.s32.totalorder %s20, 0
      %p110 = por %p108, %p109
      %s112 = sadd.s32 %s111, 1
      %p115 = scmp.eq.s32.totalorder %s14, 1
      %p116 = scmp.ne.s32.totalorder %s111, %s113
      %p117 = scmp.eq.s32.totalorder %s14, 0
      %p118 = por %p116, %p117
      %p119 = scmp.ne.s32.totalorder %s111, %s113
      %p120 = scmp.eq.s32.totalorder %s19, 1
      %p121 = por %p119, %p120
      %p122 = scmp.ne.s32.totalorder %s113, %s114
      %p123 = scmp.eq.s32.totalorder %s19, 0
      %p124 = por %p122, %p123
      %p125 = scmp.ne.s32.totalorder %s113, %s114
      %p126 = scmp.eq.s32.totalorder %s20, 1
      %p127 = por %p125, %p126
      %p129 = scmp.ne.s32.totalorder %s114, %s128
      %p130 = scmp.eq.s32.totalorder %s20, 0
      %p131 = por %p129, %p130
      %s132 = ssub.s32 %s21, %s33
      %s133 = ssub.s32 %s22, %s29
      %s134 = sor.u32 %s132, %s133
      %p135 = scmp.eq.s32.totalorder %s134, 0
      %s137 = sadd.s32 %s136, 1
      %s138 = scalar_select %p135, %s136, %s137
      %p141 = pneg %p135
      %p142 = scmp.eq.s32.totalorder %s14, 1
      %p143 = por %p141, %p142
      %p144 = scmp.ne.s32.totalorder %s136, %s139
      %p145 = scmp.eq.s32.totalorder %s14, 0
      %p146 = por %p144, %p145
      %p147 = scmp.ne.s32.totalorder %s136, %s139
      %p148 = scmp.eq.s32.totalorder %s19, 1
      %p149 = por %p147, %p148
      %p150 = scmp.ne.s32.totalorder %s139, %s140
      %p151 = scmp.eq.s32.totalorder %s19, 0
      %p152 = por %p150, %p151
      %p153 = scmp.ne.s32.totalorder %s139, %s140
      %p154 = scmp.eq.s32.totalorder %s20, 1
      %p155 = por %p153, %p154
      %p157 = scmp.ne.s32.totalorder %s140, %s156
      %p158 = scmp.eq.s32.totalorder %s20, 0
      %p159 = por %p157, %p158
      %p160 = scmp.le.s32.totalorder 1, %s14
      %p161 = scmp.lt.s32.totalorder %s14, 3
      %p162 = pnand %p160, %p161
      %p163 = pneg %p162
      // Predicated region
      $region9: #{tpu_custom_call.1} parent=5 // pred_check
        _
      $region10: #{tpu_custom_call.1} parent=5 // pred_check_branch
        %165 = sbr.rel (%p162) target = $region12
      $region11: #{tpu_custom_call.1} parent=5 // pred_region
        %s166 = ssub.s32 %s14, 1
        // Predicated region
        $region13: #{tpu_custom_call.1} parent=11 // pred_check
          %p167 = pneg %p103
        $region14: #{tpu_custom_call.1} parent=11 // pred_check_branch
          %169 = sbr.rel (%p167) target = $region16
        $region15: #{tpu_custom_call.1} parent=11 // pred_region
          %s171 = ssub.s32 1536, 1536
          %172 = vsyncadd [#allocation3], %s171
          %s173 = sshll.u32 [#allocation2], 4
          %s174 = int_to_ptr.vmem [resolvable:$true] %s173
          %179 = dma.hbm_to_vmem [thread:$0]  %s2, 1536, %s174, [#allocation3], 128, 128, 8
        $region16: #{tpu_custom_call.1} parent=11 // pred_fallthru
          _
        // Predicated region
        $region17: #{tpu_custom_call.1} parent=11 // pred_check
          %p180 = pneg %p124
        $region18: #{tpu_custom_call.1} parent=11 // pred_check_branch
          %182 = sbr.rel (%p180) target = $region20
        $region19: #{tpu_custom_call.1} parent=11 // pred_region
          _
        $region20: #{tpu_custom_call.1} parent=11 // pred_fallthru
          _
      $region12: #{tpu_custom_call.1} parent=5 // pred_fallthru
        _
      %p183 = scmp.lt.s32.totalorder %s14, 2
      // Predicated region
      $region21: #{tpu_custom_call.1} parent=5 // pred_check
        %p184 = pneg %p183
      $region22: #{tpu_custom_call.1} parent=5 // pred_check_branch
        %186 = sbr.rel (%p184) target = $region24
      $region23: #{tpu_custom_call.1} parent=5 // pred_region
        // Predicated region
        $region25: #{tpu_custom_call.1} parent=23 // pred_check
          %p187 = pneg %p48
        $region26: #{tpu_custom_call.1} parent=23 // pred_check_branch
          %189 = sbr.rel (%p187) target = $region28
        $region27: #{tpu_custom_call.1} parent=23 // pred_region
          %s190 = smul.u32 2, %s22
          %p191 = scmp.lt.s32.totalorder %s21, 1
          %s192 = scalar_select %p191, %s21, 1
          %p193 = scmp.lt.s32.totalorder %s190, 1
          %s194 = scalar_select %p193, %s190, 1
          %s195 = smul.addr %s192, 2
          %s196 = sadd.s32 %s194, %s195
          %s197 = smul.addr %s196, 4
          %s198 = scalar_lea.vmem %s0, %s197
          %s199 = smul.u32 2, %s22
        $region28: #{tpu_custom_call.1} parent=23 // pred_fallthru
          _
        // Predicated region
        $region29: #{tpu_custom_call.1} parent=23 // pred_check
          %p200 = pneg %p76
        $region30: #{tpu_custom_call.1} parent=23 // pred_check_branch
          %202 = sbr.rel (%p200) target = $region32
        $region31: #{tpu_custom_call.1} parent=23 // pred_region
          %s203 = smul.u32 2, %s22
          %p204 = scmp.lt.s32.totalorder %s21, 1
          %s205 = scalar_select %p204, %s21, 1
          %p206 = scmp.lt.s32.totalorder %s203, 1
          %s207 = scalar_select %p206, %s203, 1
          %s208 = smul.addr %s205, 2
          %s209 = sadd.s32 %s207, %s208
          %s210 = smul.addr %s209, 4
          %s211 = scalar_lea.vmem %s1, %s210
          %s212 = smul.u32 2, %s22
        $region32: #{tpu_custom_call.1} parent=23 // pred_fallthru
          _
      $region24: #{tpu_custom_call.1} parent=5 // pred_fallthru
        _
      %p213 = scmp.le.s32.totalorder 1, %s14
      %p214 = scmp.lt.s32.totalorder %s14, 3
      %p215 = pnand %p213, %p214
      %p216 = pneg %p215
      // Predicated region
      $region33: #{tpu_custom_call.1} parent=5 // pred_check
        _
      $region34: #{tpu_custom_call.1} parent=5 // pred_check_branch
        %218 = sbr.rel (%p215) target = $region36
      $region35: #{tpu_custom_call.1} parent=5 // pred_region
        %s219 = ssub.s32 %s14, 1
        // Predicated region
        $region37: #{tpu_custom_call.1} parent=35 // pred_check
          %p220 = pneg %p103
        $region38: #{tpu_custom_call.1} parent=35 // pred_check_branch
          %222 = sbr.rel (%p220) target = $region40
        $region39: #{tpu_custom_call.1} parent=35 // pred_region
          %223 = dma.done [#allocation3], 1536
        $region40: #{tpu_custom_call.1} parent=35 // pred_fallthru
          _
        %s224 = smul.u32 2, %s24
        %p225 = scmp.lt.s32.totalorder %s23, 1
        %s226 = scalar_select %p225, %s23, 1
        %p227 = scmp.lt.s32.totalorder %s224, 1
        %s228 = scalar_select %p227, %s224, 1
        %s229 = smul.addr %s226, 2
        %s230 = sadd.s32 %s228, %s229
        %s231 = smul.addr %s230, 4
        %s232 = scalar_lea.vmem %s0, %s231
        %p233 = pneg %p54
        %p234 = pneg %p51
        %s235 = smul.u32 2, %s24
        %p236 = scmp.lt.s32.totalorder %s23, 1
        %s237 = scalar_select %p236, %s23, 1
        %p238 = scmp.lt.s32.totalorder %s235, 1
        %s239 = scalar_select %p238, %s235, 1
        %s240 = smul.addr %s237, 2
        %s241 = sadd.s32 %s239, %s240
        %s242 = smul.addr %s241, 4
        %s243 = scalar_lea.vmem %s1, %s242
        %p244 = pneg %p82
        %p245 = pneg %p79
        %p246 = pneg %p103
        %p247 = pneg %p100
        %p248 = pneg %p124
        %p249 = pneg %p121
        %p250 = pneg %p152
        %p251 = pneg %p149
        %s252 = sand.u32 %s139, 1
        %s253 = scalar_lea.sflag [#allocation4], %s252
        %s254 = sand.u32 %s139, 1
        %s255 = smul.addr %s254, 8
        %s256 = scalar_lea.vmem [#allocation5], %s255
        %s257 = smul.u32 2, %s24
        %p258 = scmp.lt.s32.totalorder %s23, 1
        %s259 = scalar_select %p258, %s23, 1
        %p260 = scmp.lt.s32.totalorder %s257, 1
        %s261 = scalar_select %p260, %s257, 1
        %s262 = smul.addr %s259, 2
        %s263 = sadd.s32 %s261, %s262
        %s264 = smul.addr %s263, 4
        %s265 = scalar_lea.vmem %s0, %s264
        %s266 = smul.u32 2, %s24
        %s267 = smul.u32 2, %s24
        %p268 = scmp.lt.s32.totalorder %s23, 1
        %s269 = scalar_select %p268, %s23, 1
        %p270 = scmp.lt.s32.totalorder %s267, 1
        %s271 = scalar_select %p270, %s267, 1
        %s272 = smul.addr %s269, 2
        %s273 = sadd.s32 %s271, %s272
        %s274 = smul.addr %s273, 4
        %s275 = scalar_lea.vmem %s1, %s274
        %s276 = smul.u32 2, %s24
        %s277 = smul.u32 2, %s24
        %v278 = vld [vmem:[%s265] sm:$0xff]
        %v279 = vld [vmem:[%s275] sm:$0xff]
        %v280 = vld [vmem:[%s3] sm:$0xff]
        %v281 = vld [vmem:[%s3 + $0x8] sm:$0xff]
        %v282 = vld [vmem:[%s3 + $0x10] sm:$0xff]
        %v283 = vld [vmem:[#allocation2] sm:$0xff]
        %v284 = vld [vmem:[#allocation2 + $0x8] sm:$0xff]
        %v285 = vld [vmem:[#allocation2 + $0x10] sm:$0xff]
        %289 = vrot.lane.b32.xlu0 %v283, 124
        %v290 = vpop.permute.xlu0 %289
        %291 = vrot.lane.b32.xlu0 %v284, 124
        %v292 = vpop.permute.xlu0 %291
        %293 = vrot.lane.b32.xlu0 %v285, 124
        %v294 = vpop.permute.xlu0 %293
        %v296 = vcombine.high %v279, %v279
        %vm297 = vcmask 31744
        %v298 = vsel %vm297, %v290, 0
        %v300 = vsel %vm297, %v292, 0
        %v302 = vsel %vm297, %v294, 0
        %vm304 = vcmask 1043456
        %v305 = vsel %vm304, %v279, 0
        %v307 = vsel %vm304, %v296, 0
        %309 = vmatprep.subr.mxu0 %v307
        %310 = vmatpush1.msra.mxu0 %v305
        %311 = vmatprep.subr.mxu0 0.0
        %312 = vmatpush1.msra.mxu0 0.0
        %313 = vmatprep.subr.mxu0 0.0
        %314 = vmatpush1.msra.mxu0 0.0
        %315 = vmatprep.subr.mxu0 0.0
        %316 = vmatpush1.msra.mxu0 0.0
        %317 = vmatprep.subr.mxu0 0.0
        %318 = vmatpush1.msra.mxu0 0.0
        %319 = vmatprep.subr.mxu0 0.0
        %320 = vmatpush1.msra.mxu0 0.0
        %321 = vmatprep.subr.mxu0 0.0
        %322 = vmatpush1.msra.mxu0 0.0
        %323 = vmatprep.subr.mxu0 0.0
        %324 = vmatpush1.msra.mxu0 0.0
        %325 = vmatprep.subr.mxu0 0.0
        %326 = vmatpush1.msra.mxu0 0.0
        %327 = vmatprep.subr.mxu0 0.0
        %328 = vmatpush1.msra.mxu0 0.0
        %329 = vmatprep.subr.mxu0 0.0
        %330 = vmatpush1.msra.mxu0 0.0
        %331 = vmatprep.subr.mxu0 0.0
        %332 = vmatpush1.msra.mxu0 0.0
        %333 = vmatprep.subr.mxu0 0.0
        %334 = vmatpush1.msra.mxu0 0.0
        %335 = vmatprep.subr.mxu0 0.0
        %336 = vmatpush1.msra.mxu0 0.0
        %337 = vmatprep.subr.mxu0 0.0
        %338 = vmatpush1.msra.mxu0 0.0
        %339 = vmatprep.subr.mxu0 0.0
        %340 = vmatpush1.msra.mxu0 0.0
        %341 = vmatprep.subr.mxu0 0.0
        %342 = vmatpush1.msra.mxu0 0.0
        %343 = vmatprep.subr.mxu0 0.0
        %344 = vmatpush1.msra.mxu0 0.0
        %345 = vmatprep.subr.mxu0 0.0
        %346 = vmatpush1.msra.mxu0 0.0
        %347 = vmatprep.subr.mxu0 0.0
        %348 = vmatpush1.msra.mxu0 0.0
        %349 = vmatprep.subr.mxu0 0.0
        %350 = vmatpush1.msra.mxu0 0.0
        %351 = vmatprep.subr.mxu0 0.0
        %352 = vmatpush1.msra.mxu0 0.0
        %353 = vmatprep.subr.mxu0 0.0
        %354 = vmatpush1.msra.mxu0 0.0
        %355 = vmatprep.subr.mxu0 0.0
        %356 = vmatpush1.msra.mxu0 0.0
        %357 = vmatprep.subr.mxu0 0.0
        %358 = vmatpush1.msra.mxu0 0.0
        %359 = vmatprep.subr.mxu0 0.0
        %360 = vmatpush1.msra.mxu0 0.0
        %361 = vmatprep.subr.mxu0 0.0
        %362 = vmatpush1.msra.mxu0 0.0
        %363 = vmatprep.subr.mxu0 0.0
        %364 = vmatpush1.msra.mxu0 0.0
        %365 = vmatprep.subr.mxu0 0.0
        %366 = vmatpush1.msra.mxu0 0.0
        %367 = vmatprep.subr.mxu0 0.0
        %368 = vmatpush1.msra.mxu0 0.0
        %369 = vmatprep.subr.mxu0 0.0
        %370 = vmatpush1.msra.mxu0 0.0
        %371 = vmatprep.subr.mxu0 0.0
        %372 = vmatpush1.msra.mxu0 0.0
        %373 = vmatprep.mubr.f32.mxu0 0.0
        %374 = vmatmul.mubr.f32.gmra.mrb[0].mxu0 %v298
        %v375 = vpop.f32.mrb[0].mxu0
        %v376 = vadd.f32 0.0, %v375
        %v377 = vpop.f32.mrb[0].mxu0
        %v378 = vadd.f32 0.0, %v377
        %379 = vmatprep.mubr.f32.mxu0 0.0
        %380 = vmatmul.mubr.f32.gmra.mrb[0].mxu0 %v300
        %v381 = vpop.f32.mrb[0].mxu0
        %v382 = vadd.f32 0.0, %v381
        %v383 = vpop.f32.mrb[0].mxu0
        %v384 = vadd.f32 0.0, %v383
        %385 = vmatprep.mubr.f32.mxu0 0.0
        %386 = vmatmul.mubr.f32.gmra.mrb[0].mxu0 %v302
        %v387 = vpop.f32.mrb[0].mxu0
        %v388 = vadd.f32 0.0, %v387
        %v389 = vpop.f32.mrb[0].mxu0
        %v390 = vadd.f32 0.0, %v389
        %391 = vdwg.mxu0
        %v393 = vcombine.high %v278, %v278
        %v394 = vsel %vm297, %v283, 0
        %v396 = vsel %vm297, %v284, 0
        %v398 = vsel %vm297, %v285, 0
        %v400 = vsel %vm304, %v278, 0
        %v402 = vsel %vm304, %v393, 0
        %404 = vmatprep.subr.mxu0 %v402
        %405 = vmatpush1.msra.mxu0 %v400
        %406 = vmatprep.subr.mxu0 0.0
        %407 = vmatpush1.msra.mxu0 0.0
        %408 = vmatprep.subr.mxu0 0.0
        %409 = vmatpush1.msra.mxu0 0.0
        %410 = vmatprep.subr.mxu0 0.0
        %411 = vmatpush1.msra.mxu0 0.0
        %412 = vmatprep.subr.mxu0 0.0
        %413 = vmatpush1.msra.mxu0 0.0
        %414 = vmatprep.subr.mxu0 0.0
        %415 = vmatpush1.msra.mxu0 0.0
        %416 = vmatprep.subr.mxu0 0.0
        %417 = vmatpush1.msra.mxu0 0.0
        %418 = vmatprep.subr.mxu0 0.0
        %419 = vmatpush1.msra.mxu0 0.0
        %420 = vmatprep.subr.mxu0 0.0
        %421 = vmatpush1.msra.mxu0 0.0
        %422 = vmatprep.subr.mxu0 0.0
        %423 = vmatpush1.msra.mxu0 0.0
        %424 = vmatprep.subr.mxu0 0.0
        %425 = vmatpush1.msra.mxu0 0.0
        %426 = vmatprep.subr.mxu0 0.0
        %427 = vmatpush1.msra.mxu0 0.0
        %428 = vmatprep.subr.mxu0 0.0
        %429 = vmatpush1.msra.mxu0 0.0
        %430 = vmatprep.subr.mxu0 0.0
        %431 = vmatpush1.msra.mxu0 0.0
        %432 = vmatprep.subr.mxu0 0.0
        %433 = vmatpush1.msra.mxu0 0.0
        %434 = vmatprep.subr.mxu0 0.0
        %435 = vmatpush1.msra.mxu0 0.0
        %436 = vmatprep.subr.mxu0 0.0
        %437 = vmatpush1.msra.mxu0 0.0
        %438 = vmatprep.subr.mxu0 0.0
        %439 = vmatpush1.msra.mxu0 0.0
        %440 = vmatprep.subr.mxu0 0.0
        %441 = vmatpush1.msra.mxu0 0.0
        %442 = vmatprep.subr.mxu0 0.0
        %443 = vmatpush1.msra.mxu0 0.0
        %444 = vmatprep.subr.mxu0 0.0
        %445 = vmatpush1.msra.mxu0 0.0
        %446 = vmatprep.subr.mxu0 0.0
        %447 = vmatpush1.msra.mxu0 0.0
        %448 = vmatprep.subr.mxu0 0.0
        %449 = vmatpush1.msra.mxu0 0.0
        %450 = vmatprep.subr.mxu0 0.0
        %451 = vmatpush1.msra.mxu0 0.0
        %452 = vmatprep.subr.mxu0 0.0
        %453 = vmatpush1.msra.mxu0 0.0
        %454 = vmatprep.subr.mxu0 0.0
        %455 = vmatpush1.msra.mxu0 0.0
        %456 = vmatprep.subr.mxu0 0.0
        %457 = vmatpush1.msra.mxu0 0.0
        %458 = vmatprep.subr.mxu0 0.0
        %459 = vmatpush1.msra.mxu0 0.0
        %460 = vmatprep.subr.mxu0 0.0
        %461 = vmatpush1.msra.mxu0 0.0
        %462 = vmatprep.subr.mxu0 0.0
        %463 = vmatpush1.msra.mxu0 0.0
        %464 = vmatprep.subr.mxu0 0.0
        %465 = vmatpush1.msra.mxu0 0.0
        %466 = vmatprep.subr.mxu0 0.0
        %467 = vmatpush1.msra.mxu0 0.0
        %468 = vmatprep.mubr.f32.mxu0 0.0
        %469 = vmatmul.mubr.f32.gmra.mrb[0].mxu0 %v394
        %v470 = vpop.f32.mrb[0].mxu0
        %v471 = vadd.f32 %v376, %v470
        %v472 = vpop.f32.mrb[0].mxu0
        %v473 = vadd.f32 %v378, %v472
        %474 = vmatprep.mubr.f32.mxu0 0.0
        %475 = vmatmul.mubr.f32.gmra.mrb[0].mxu0 %v396
        %v476 = vpop.f32.mrb[0].mxu0
        %v477 = vadd.f32 %v382, %v476
        %v478 = vpop.f32.mrb[0].mxu0
        %v479 = vadd.f32 %v384, %v478
        %480 = vmatprep.mubr.f32.mxu0 0.0
        %481 = vmatmul.mubr.f32.gmra.mrb[0].mxu0 %v398
        %v482 = vpop.f32.mrb[0].mxu0
        %v483 = vadd.f32 %v388, %v482
        %v484 = vpop.f32.mrb[0].mxu0
        %v485 = vadd.f32 %v390, %v484
        %486 = vdwg.mxu0
        %488 = vset.pattern.permute.xlu0 0
        %489 = vperm.xlu0 %488, %v280
        %v490 = vpop.permute.xlu0 %489
        %493 = vset.pattern.permute.xlu0 0
        %494 = vperm.xlu0 %493, %v281
        %v495 = vpop.permute.xlu0 %494
        %498 = vset.pattern.permute.xlu0 0
        %499 = vperm.xlu0 %498, %v282
        %v500 = vpop.permute.xlu0 %499
        %v502 = vadd.f32 %v471, %v490
        %v503 = vadd.f32 %v473, %v490
        %v504 = vadd.f32 %v477, %v495
        %v505 = vadd.f32 %v479, %v495
        %v506 = vadd.f32 %v483, %v500
        %v507 = vadd.f32 %v485, %v500
        %v508 = vmax.f32 %v502, 0.0
        %v509 = vmax.f32 %v503, 0.0
        %v510 = vmax.f32 %v504, 0.0
        %v511 = vmax.f32 %v505, 0.0
        %v512 = vmax.f32 %v506, 0.0
        %v513 = vmax.f32 %v507, 0.0
        %s514 = scalar_lea.vmem [#allocation2], 24
        %v515 = vld [vmem:[%s514] sm:$0xff]
        %v516 = vld [vmem:[%s514 + $0x8] sm:$0xff]
        %v517 = vld [vmem:[%s514 + $0x10] sm:$0xff]
        %518 = vset.pattern.permute.xlu0 1
        %519 = vperm.xlu0 %518, %v280
        %v520 = vpop.permute.xlu0 %519
        %522 = vset.pattern.permute.xlu0 1
        %523 = vperm.xlu0 %522, %v281
        %v524 = vpop.permute.xlu0 %523
        %526 = vset.pattern.permute.xlu0 1
        %527 = vperm.xlu0 %526, %v282
        %v528 = vpop.permute.xlu0 %527
        %vm530 = vcmask 195584
        %v532 = vsel %vm530, %v515, 0
        %v535 = vsel %vm530, %v516, 0
        %v538 = vsel %vm530, %v517, 0
        %540 = vmatprep.subr.mxu0 %v509
        %541 = vmatpush1.msra.mxu0 %v508
        %542 = vmatprep.subr.mxu0 %v511
        %543 = vmatpush1.msra.mxu0 %v510
        %544 = vmatprep.subr.mxu0 %v513
        %545 = vmatpush1.msra.mxu0 %v512
        %546 = vmatprep.subr.mxu0 0.0
        %547 = vmatpush1.msra.mxu0 0.0
        %548 = vmatprep.subr.mxu0 0.0
        %549 = vmatpush1.msra.mxu0 0.0
        %550 = vmatprep.subr.mxu0 0.0
        %551 = vmatpush1.msra.mxu0 0.0
        %552 = vmatprep.subr.mxu0 0.0
        %553 = vmatpush1.msra.mxu0 0.0
        %554 = vmatprep.subr.mxu0 0.0
        %555 = vmatpush1.msra.mxu0 0.0
        %556 = vmatprep.subr.mxu0 0.0
        %557 = vmatpush1.msra.mxu0 0.0
        %558 = vmatprep.subr.mxu0 0.0
        %559 = vmatpush1.msra.mxu0 0.0
        %560 = vmatprep.subr.mxu0 0.0
        %561 = vmatpush1.msra.mxu0 0.0
        %562 = vmatprep.subr.mxu0 0.0
        %563 = vmatpush1.msra.mxu0 0.0
        %564 = vmatprep.subr.mxu0 0.0
        %565 = vmatpush1.msra.mxu0 0.0
        %566 = vmatprep.subr.mxu0 0.0
        %567 = vmatpush1.msra.mxu0 0.0
        %568 = vmatprep.subr.mxu0 0.0
        %569 = vmatpush1.msra.mxu0 0.0
        %570 = vmatprep.subr.mxu0 0.0
        %571 = vmatpush1.msra.mxu0 0.0
        %572 = vmatprep.subr.mxu0 0.0
        %573 = vmatpush1.msra.mxu0 0.0
        %574 = vmatprep.subr.mxu0 0.0
        %575 = vmatpush1.msra.mxu0 0.0
        %576 = vmatprep.subr.mxu0 0.0
        %577 = vmatpush1.msra.mxu0 0.0
        %578 = vmatprep.subr.mxu0 0.0
        %579 = vmatpush1.msra.mxu0 0.0
        %580 = vmatprep.subr.mxu0 0.0
        %581 = vmatpush1.msra.mxu0 0.0
        %582 = vmatprep.subr.mxu0 0.0
        %583 = vmatpush1.msra.mxu0 0.0
        %584 = vmatprep.subr.mxu0 0.0
        %585 = vmatpush1.msra.mxu0 0.0
        %586 = vmatprep.subr.mxu0 0.0
        %587 = vmatpush1.msra.mxu0 0.0
        %588 = vmatprep.subr.mxu0 0.0
        %589 = vmatpush1.msra.mxu0 0.0
        %590 = vmatprep.subr.mxu0 0.0
        %591 = vmatpush1.msra.mxu0 0.0
        %592 = vmatprep.subr.mxu0 0.0
        %593 = vmatpush1.msra.mxu0 0.0
        %594 = vmatprep.subr.mxu0 0.0
        %595 = vmatpush1.msra.mxu0 0.0
        %596 = vmatprep.subr.mxu0 0.0
        %597 = vmatpush1.msra.mxu0 0.0
        %598 = vmatprep.subr.mxu0 0.0
        %599 = vmatpush1.msra.mxu0 0.0
        %600 = vmatprep.subr.mxu0 0.0
        %601 = vmatpush1.msra.mxu0 0.0
        %602 = vmatprep.subr.mxu0 0.0
        %603 = vmatpush1.msra.mxu0 0.0
        %604 = vmatprep.mubr.f32.mxu0 0.0
        %605 = vmatmul.mubr.f32.gmra.mrb[0].mxu0 %v532
        %v606 = vpop.f32.mrb[0].mxu0
        %v607 = vadd.f32 %v520, %v606
        %v608 = vpop.f32.mrb[0].mxu0
        %v609 = vadd.f32 %v520, %v608
        %610 = vmatprep.mubr.f32.mxu0 0.0
        %611 = vmatmul.mubr.f32.gmra.mrb[0].mxu0 %v535
        %v612 = vpop.f32.mrb[0].mxu0
        %v613 = vadd.f32 %v524, %v612
        %v614 = vpop.f32.mrb[0].mxu0
        %v615 = vadd.f32 %v524, %v614
        %616 = vmatprep.mubr.f32.mxu0 0.0
        %617 = vmatmul.mubr.f32.gmra.mrb[0].mxu0 %v538
        %v618 = vpop.f32.mrb[0].mxu0
        %v619 = vadd.f32 %v528, %v618
        %v620 = vpop.f32.mrb[0].mxu0
        %v621 = vadd.f32 %v528, %v620
        %622 = vdwg.mxu0
        %v623 = vmax.f32 %v607, 0.0
        %v624 = vmax.f32 %v609, 0.0
        %v625 = vmax.f32 %v613, 0.0
        %v626 = vmax.f32 %v615, 0.0
        %v627 = vmax.f32 %v619, 0.0
        %v628 = vmax.f32 %v621, 0.0
        %s629 = scalar_lea.vmem [#allocation2], 48
        %v630 = vld [vmem:[%s629] sm:$0xff]
        %v631 = vld [vmem:[%s629 + $0x8] sm:$0xff]
        %v632 = vld [vmem:[%s629 + $0x10] sm:$0xff]
        %633 = vset.pattern.permute.xlu0 2
        %634 = vperm.xlu0 %633, %v280
        %v635 = vpop.permute.xlu0 %634
        %637 = vset.pattern.permute.xlu0 2
        %638 = vperm.xlu0 %637, %v281
        %v639 = vpop.permute.xlu0 %638
        %641 = vset.pattern.permute.xlu0 2
        %642 = vperm.xlu0 %641, %v282
        %v643 = vpop.permute.xlu0 %642
        %v646 = vsel %vm530, %v630, 0
        %v649 = vsel %vm530, %v631, 0
        %v652 = vsel %vm530, %v632, 0
        %654 = vmatprep.subr.mxu0 %v624
        %655 = vmatpush1.msra.mxu0 %v623
        %656 = vmatprep.subr.mxu0 %v626
        %657 = vmatpush1.msra.mxu0 %v625
        %658 = vmatprep.subr.mxu0 %v628
        %659 = vmatpush1.msra.mxu0 %v627
        %660 = vmatprep.subr.mxu0 0.0
        %661 = vmatpush1.msra.mxu0 0.0
        %662 = vmatprep.subr.mxu0 0.0
        %663 = vmatpush1.msra.mxu0 0.0
        %664 = vmatprep.subr.mxu0 0.0
        %665 = vmatpush1.msra.mxu0 0.0
        %666 = vmatprep.subr.mxu0 0.0
        %667 = vmatpush1.msra.mxu0 0.0
        %668 = vmatprep.subr.mxu0 0.0
        %669 = vmatpush1.msra.mxu0 0.0
        %670 = vmatprep.subr.mxu0 0.0
        %671 = vmatpush1.msra.mxu0 0.0
        %672 = vmatprep.subr.mxu0 0.0
        %673 = vmatpush1.msra.mxu0 0.0
        %674 = vmatprep.subr.mxu0 0.0
        %675 = vmatpush1.msra.mxu0 0.0
        %676 = vmatprep.subr.mxu0 0.0
        %677 = vmatpush1.msra.mxu0 0.0
        %678 = vmatprep.subr.mxu0 0.0
        %679 = vmatpush1.msra.mxu0 0.0
        %680 = vmatprep.subr.mxu0 0.0
        %681 = vmatpush1.msra.mxu0 0.0
        %682 = vmatprep.subr.mxu0 0.0
        %683 = vmatpush1.msra.mxu0 0.0
        %684 = vmatprep.subr.mxu0 0.0
        %685 = vmatpush1.msra.mxu0 0.0
        %686 = vmatprep.subr.mxu0 0.0
        %687 = vmatpush1.msra.mxu0 0.0
        %688 = vmatprep.subr.mxu0 0.0
        %689 = vmatpush1.msra.mxu0 0.0
        %690 = vmatprep.subr.mxu0 0.0
        %691 = vmatpush1.msra.mxu0 0.0
        %692 = vmatprep.subr.mxu0 0.0
        %693 = vmatpush1.msra.mxu0 0.0
        %694 = vmatprep.subr.mxu0 0.0
        %695 = vmatpush1.msra.mxu0 0.0
        %696 = vmatprep.subr.mxu0 0.0
        %697 = vmatpush1.msra.mxu0 0.0
        %698 = vmatprep.subr.mxu0 0.0
        %699 = vmatpush1.msra.mxu0 0.0
        %700 = vmatprep.subr.mxu0 0.0
        %701 = vmatpush1.msra.mxu0 0.0
        %702 = vmatprep.subr.mxu0 0.0
        %703 = vmatpush1.msra.mxu0 0.0
        %704 = vmatprep.subr.mxu0 0.0
        %705 = vmatpush1.msra.mxu0 0.0
        %706 = vmatprep.subr.mxu0 0.0
        %707 = vmatpush1.msra.mxu0 0.0
        %708 = vmatprep.subr.mxu0 0.0
        %709 = vmatpush1.msra.mxu0 0.0
        %710 = vmatprep.subr.mxu0 0.0
        %711 = vmatpush1.msra.mxu0 0.0
        %712 = vmatprep.subr.mxu0 0.0
        %713 = vmatpush1.msra.mxu0 0.0
        %714 = vmatprep.subr.mxu0 0.0
        %715 = vmatpush1.msra.mxu0 0.0
        %716 = vmatprep.subr.mxu0 0.0
        %717 = vmatpush1.msra.mxu0 0.0
        %718 = vmatprep.mubr.f32.mxu0 0.0
        %719 = vmatmul.mubr.f32.gmra.mrb[0].mxu0 %v646
        %v720 = vpop.f32.mrb[0].mxu0
        %v721 = vadd.f32 %v635, %v720
        %v722 = vpop.f32.mrb[0].mxu0
        %v723 = vadd.f32 %v635, %v722
        %724 = vmatprep.mubr.f32.mxu0 0.0
        %725 = vmatmul.mubr.f32.gmra.mrb[0].mxu0 %v649
        %v726 = vpop.f32.mrb[0].mxu0
        %v727 = vadd.f32 %v639, %v726
        %v728 = vpop.f32.mrb[0].mxu0
        %v729 = vadd.f32 %v639, %v728
        %730 = vmatprep.mubr.f32.mxu0 0.0
        %731 = vmatmul.mubr.f32.gmra.mrb[0].mxu0 %v652
        %v732 = vpop.f32.mrb[0].mxu0
        %v733 = vadd.f32 %v643, %v732
        %v734 = vpop.f32.mrb[0].mxu0
        %v735 = vadd.f32 %v643, %v734
        %736 = vdwg.mxu0
        %v737 = vmax.f32 %v721, 0.0
        %v738 = vmax.f32 %v723, 0.0
        %v739 = vmax.f32 %v727, 0.0
        %v740 = vmax.f32 %v729, 0.0
        %v741 = vmax.f32 %v733, 0.0
        %v742 = vmax.f32 %v735, 0.0
        %s743 = scalar_lea.vmem [#allocation2], 72
        %v744 = vld [vmem:[%s743] sm:$0xff]
        %745 = vset.pattern.permute.xlu0 3
        %746 = vperm.xlu0 %745, %v280
        %v747 = vpop.permute.xlu0 %746
        %v750 = vsel %vm530, %v744, 0
        %752 = vmatprep.subr.mxu0 %v738
        %753 = vmatpush1.msra.mxu0 %v737
        %754 = vmatprep.subr.mxu0 %v740
        %755 = vmatpush1.msra.mxu0 %v739
        %756 = vmatprep.subr.mxu0 %v742
        %757 = vmatpush1.msra.mxu0 %v741
        %758 = vmatprep.subr.mxu0 0.0
        %759 = vmatpush1.msra.mxu0 0.0
        %760 = vmatprep.subr.mxu0 0.0
        %761 = vmatpush1.msra.mxu0 0.0
        %762 = vmatprep.subr.mxu0 0.0
        %763 = vmatpush1.msra.mxu0 0.0
        %764 = vmatprep.subr.mxu0 0.0
        %765 = vmatpush1.msra.mxu0 0.0
        %766 = vmatprep.subr.mxu0 0.0
        %767 = vmatpush1.msra.mxu0 0.0
        %768 = vmatprep.subr.mxu0 0.0
        %769 = vmatpush1.msra.mxu0 0.0
        %770 = vmatprep.subr.mxu0 0.0
        %771 = vmatpush1.msra.mxu0 0.0
        %772 = vmatprep.subr.mxu0 0.0
        %773 = vmatpush1.msra.mxu0 0.0
        %774 = vmatprep.subr.mxu0 0.0
        %775 = vmatpush1.msra.mxu0 0.0
        %776 = vmatprep.subr.mxu0 0.0
        %777 = vmatpush1.msra.mxu0 0.0
        %778 = vmatprep.subr.mxu0 0.0
        %779 = vmatpush1.msra.mxu0 0.0
        %780 = vmatprep.subr.mxu0 0.0
        %781 = vmatpush1.msra.mxu0 0.0
        %782 = vmatprep.subr.mxu0 0.0
        %783 = vmatpush1.msra.mxu0 0.0
        %784 = vmatprep.subr.mxu0 0.0
        %785 = vmatpush1.msra.mxu0 0.0
        %786 = vmatprep.subr.mxu0 0.0
        %787 = vmatpush1.msra.mxu0 0.0
        %788 = vmatprep.subr.mxu0 0.0
        %789 = vmatpush1.msra.mxu0 0.0
        %790 = vmatprep.subr.mxu0 0.0
        %791 = vmatpush1.msra.mxu0 0.0
        %792 = vmatprep.subr.mxu0 0.0
        %793 = vmatpush1.msra.mxu0 0.0
        %794 = vmatprep.subr.mxu0 0.0
        %795 = vmatpush1.msra.mxu0 0.0
        %796 = vmatprep.subr.mxu0 0.0
        %797 = vmatpush1.msra.mxu0 0.0
        %798 = vmatprep.subr.mxu0 0.0
        %799 = vmatpush1.msra.mxu0 0.0
        %800 = vmatprep.subr.mxu0 0.0
        %801 = vmatpush1.msra.mxu0 0.0
        %802 = vmatprep.subr.mxu0 0.0
        %803 = vmatpush1.msra.mxu0 0.0
        %804 = vmatprep.subr.mxu0 0.0
        %805 = vmatpush1.msra.mxu0 0.0
        %806 = vmatprep.subr.mxu0 0.0
        %807 = vmatpush1.msra.mxu0 0.0
        %808 = vmatprep.subr.mxu0 0.0
        %809 = vmatpush1.msra.mxu0 0.0
        %810 = vmatprep.subr.mxu0 0.0
        %811 = vmatpush1.msra.mxu0 0.0
        %812 = vmatprep.subr.mxu0 0.0
        %813 = vmatpush1.msra.mxu0 0.0
        %814 = vmatprep.subr.mxu0 0.0
        %815 = vmatpush1.msra.mxu0 0.0
        %816 = vmatprep.mubr.f32.mxu0 0.0
        %817 = vmatmul.mubr.f32.gmra.mrb[0].mxu0 %v750
        %v818 = vpop.f32.mrb[0].mxu0
        %v819 = vadd.f32 %v747, %v818
        %v820 = vpop.f32.mrb[0].mxu0
        %v821 = vadd.f32 %v747, %v820
        %822 = vdwg.mxu0
        %v823 = vmax.f32 %v819, 0.0
        %v824 = vmax.f32 %v821, 0.0
        %825 = vset.pattern.permute.xlu0 4
        %826 = vperm.xlu0 %825, %v280
        %v827 = vpop.permute.xlu0 %826
        %v829 = vmul.f32 %v823, %v827
        %v830 = vmul.f32 %v824, %v827
        %831 = vset.pattern.permute.xlu0 5
        %832 = vperm.xlu0 %831, %v280
        %v833 = vpop.permute.xlu0 %832
        %v835 = vadd.f32 %v829, %v833
        %v836 = vadd.f32 %v830, %v833
        %v837 = vmax.f32 %v835, 0.0
        %v838 = vmax.f32 %v836, 0.0
        %v841 = vrot.slane %v837, 4
        %v842 = vrot.slane %v838, 4
        %v845 = vadd.f32 %v837, %v841
        %v846 = vadd.f32 %v838, %v842
        %v847 = vxor.u32 %v845, 2147483648
        %v848 = vxor.u32 %v846, 2147483648
        %v849 = vmul.f32 %v847, 1.442695
        %v850 = vpow.pop %v849
        %v851 = vmul.f32 %v848, 1.442695
        %v852 = vpow.pop %v851
        %v853 = vadd.f32 %v850, 1.0
        %v854 = vadd.f32 %v852, 1.0
        %v855 = vrcp.pop %v853
        %v856 = vmul.f32 1.0, %v855
        %v857 = vrcp.pop %v854
        %v858 = vmul.f32 1.0, %v857
        %v859 = vmul.f32 %v837, %v856
        %v860 = vmul.f32 %v838, %v858
        %v861 = vsub.f32 1.0, %v856
        %v862 = vsub.f32 1.0, %v858
        %v865 = vrot.slane %v861, 4
        %v866 = vrot.slane %v862, 4
        %v869 = vmul.f32 %v837, %v865
        %v870 = vmul.f32 %v838, %v866
        %v873 = vrot.slane %v869, 4
        %v874 = vrot.slane %v870, 4
        %v877 = vadd.f32 %v859, %v873
        %v878 = vadd.f32 %v860, %v874
        %v881 = vcombine.low %v877, %v878
        %883 = vst [vmem:[%s256] sm:$0xff] %v881
        %s884 = sand.u32 %s139, 1
        %s885 = scalar_lea.sflag [#allocation4], %s884
        %s886 = sand.u32 %s139, 1
        %s887 = smul.addr %s886, 8
        %s888 = scalar_lea.vmem [#allocation5], %s887
        // Predicated region
        $region41: #{tpu_custom_call.1} parent=35 // pred_check
          %p889 = pneg %p149
        $region42: #{tpu_custom_call.1} parent=35 // pred_check_branch
          %891 = sbr.rel (%p889) target = $region44
        $region43: #{tpu_custom_call.1} parent=35 // pred_region
          %s892 = smul.u32 2, %s24
          %s894 = ssub.s32 128, 128
          %895 = vsyncadd %s885, %s894
          %s896 = smul.addr %s23, 2
          %s897 = sadd.s32 %s892, %s896
          %s898 = smul.addr %s897, 64
          %s899 = scalar_lea.hbm %s4, %s898
          %s901 = sshll.u32 %s888, 4
          %s902 = int_to_ptr.vmem [resolvable:$true] %s901
          %904 = dma.vmem_to_hbm [thread:$0]  %s902, 128, %s899, %s885
        $region44: #{tpu_custom_call.1} parent=35 // pred_fallthru
          _
      $region36: #{tpu_custom_call.1} parent=5 // pred_fallthru
        _
      %p905 = scmp.le.s32.totalorder 2, %s14
      // Predicated region
      $region45: #{tpu_custom_call.1} parent=5 // pred_check
        %p906 = pneg %p905
      $region46: #{tpu_custom_call.1} parent=5 // pred_check_branch
        %908 = sbr.rel (%p906) target = $region48
      $region47: #{tpu_custom_call.1} parent=5 // pred_region
        %s909 = ssub.s32 %s14, 2
        // Predicated region
        $region49: #{tpu_custom_call.1} parent=47 // pred_check
          %p910 = pneg %p155
        $region50: #{tpu_custom_call.1} parent=47 // pred_check_branch
          %912 = sbr.rel (%p910) target = $region52
        $region51: #{tpu_custom_call.1} parent=47 // pred_region
          %s913 = sand.u32 %s140, 1
          %s914 = scalar_lea.sflag [#allocation4], %s913
          %s915 = sand.u32 %s140, 1
          %s916 = smul.addr %s915, 8
          %s917 = scalar_lea.vmem [#allocation5], %s916
          %918 = dma.done %s914, 128
        $region52: #{tpu_custom_call.1} parent=47 // pred_fallthru
          _
      $region48: #{tpu_custom_call.1} parent=5 // pred_fallthru
        _
    $region6: #{tpu_custom_call.1} parent=1 // loop_footer
      %s18 = sadd.s32 1, %s14
    $region7: #{tpu_custom_call.1} parent=1 // loop_footer_branch
      %13 = sbr.rel target = $region3
    $region8: #{tpu_custom_call.1} parent=1 // loop_exit
      _
    %919 = vsyncpa [#allocation3], 1
    %s920 = scalar_lea.sflag [#allocation3], 1
    %921 = vsyncpa %s920, 1
    %922 = vsyncpa [#allocation4], 1
    %s923 = scalar_lea.sflag [#allocation4], 1
    %924 = vsyncpa %s923, 1

</llo_original>
